<compile_context>
chip_gen: v7x
topology: tpu7x:2x2x1
jax: 0.10.0
libtpu: 0.0.40
codegen_flags: <defaults>
</compile_context>

<pallas_src>
import jax
import jax.numpy as jnp
from jax.experimental import pallas as pl
from jax.experimental.pallas import tpu as pltpu


def _crop_kernel(x_ref, o_ref):
    # x_ref: (1, TH_in, W) input row-block (may include the to-be-dropped row /
    #        boundary padding);  o_ref: (1, TH_out, W) with TH_out <= TH_in.
    # Copy only the rows the output block actually covers; Pallas discards any
    # out-of-bounds rows of a partial boundary block on writeback.
    o_ref[...] = x_ref[:, : o_ref.shape[1], :]


def crop_forward(x, *, row_tile_cap_bytes=1 << 20):
    """y = x[:, :, :H-1, :] for NCHW x, as a Pallas TPU copy kernel."""
    N, C, H, W = x.shape
    assert H >= 2, "crop needs H >= 2"
    Ho = H - 1
    itemsize = jnp.dtype(x.dtype).itemsize

    # Fuse batch and channel into one long, trivially-parallel grid axis.
    x2 = x.reshape(N * C, H, W)

    # Row-tile size: multiple of 8 sublanes, roughly <= row_tile_cap_bytes per
    # block. Small images just use full-extent blocks (always legal).
    max_rows = max(8, (row_tile_cap_bytes // max(1, W * itemsize)) // 8 * 8)

    if Ho <= max_rows or Ho < 8:
        # Whole (H, W) slice per grid step; output block is the full (Ho, W).
        grid = (N * C,)
        in_specs = [pl.BlockSpec((1, H, W), lambda b: (b, 0, 0))]
        out_specs = pl.BlockSpec((1, Ho, W), lambda b: (b, 0, 0))
        dims = ("parallel",)
    else:
        TH = max_rows
        grid = (N * C, pl.cdiv(Ho, TH))
        in_specs = [pl.BlockSpec((1, TH, W), lambda b, r: (b, r, 0))]
        out_specs = pl.BlockSpec((1, TH, W), lambda b, r: (b, r, 0))
        dims = ("parallel", "parallel")

    out = pl.pallas_call(
        _crop_kernel,
        out_shape=jax.ShapeDtypeStruct((N * C, Ho, W), x.dtype),
        grid=grid,
        in_specs=in_specs,
        out_specs=out_specs,
        compiler_params=pltpu.CompilerParams(dimension_semantics=dims),
        cost_estimate=pl.CostEstimate(
            flops=0,
            transcendentals=0,
            bytes_accessed=2 * N * C * Ho * W * itemsize,
        ),
    )(x2)
    return out.reshape(N, C, Ho, W)


def _crop_ref(x):
    return x[:, :, : x.shape[2] - 1, :]


if __name__ == "__main__":
    key = jax.random.PRNGKey(0)

    # Small shapes consistent with the module: NCHW = (2, 4, 16, 16).
    N, C, H, W = 2, 4, 16, 16
    x = jax.random.normal(key, (N, C, H, W), jnp.float32)

    ref = _crop_ref(x)

    # Path 1: full-extent blocks (default tile cap -> whole image per step).
    out_full = jax.block_until_ready(crop_forward(x))
    assert out_full.shape == (N, C, H - 1, W), out_full.shape
    assert jnp.array_equal(out_full, ref), float(jnp.max(jnp.abs(out_full - ref)))

    # Path 2: force row tiling (8-row blocks, partial boundary block) to also
    # exercise the tiled pipeline used for large images.
    out_tiled = jax.block_until_ready(crop_forward(x, row_tile_cap_bytes=512))
    assert out_tiled.shape == (N, C, H - 1, W), out_tiled.shape
    assert jnp.array_equal(out_tiled, ref), float(jnp.max(jnp.abs(out_tiled - ref)))

    print("KERNEL_OK")
</pallas_src>

<mosaic_0001>
module attributes {stable_mosaic.version = 11 : i64} {
  func.func @_crop_kernel(%arg0: i32, %arg1: memref<1x16x16xf32, #tpu.memory_space<vmem>>, %arg2: memref<1x15x16xf32, #tpu.memory_space<vmem>>) attributes {dimension_semantics = [#tpu.dimension_semantics<parallel>], iteration_bounds = array<i64: 8>, scalar_prefetch = 0 : i64, scratch_operands = 0 : i64, tpu.core_type = #tpu.core_type<tc>, window_params = [{transform_indices = @transform_0, window_bounds = array<i64: 1, 16, 16>}, {transform_indices = @transform_1, window_bounds = array<i64: 1, 15, 16>}]} {
    %c0 = arith.constant 0 : index
    %c0_0 = arith.constant 0 : index
    %c0_1 = arith.constant 0 : index
    %0 = vector.load %arg1[%c0, %c0_0, %c0_1] : memref<1x16x16xf32, #tpu.memory_space<vmem>>, vector<1x15x16xf32>
    %c0_2 = arith.constant 0 : index
    %c0_3 = arith.constant 0 : index
    %c0_4 = arith.constant 0 : index
    %1 = vector.load %arg2[%c0_2, %c0_3, %c0_4] : memref<1x15x16xf32, #tpu.memory_space<vmem>>, vector<1x15x16xf32>
    tpu.vector_store %arg2[%c0_2, %c0_3, %c0_4], %0 {strides = array<i32>} : memref<1x15x16xf32, #tpu.memory_space<vmem>>, vector<1x15x16xf32>,
    return
  }
  func.func @transform_0(%arg0: i32) -> (i32, i32, i32) {
    %c0_i32 = arith.constant 0 : i32
    %c0_i32_0 = arith.constant 0 : i32
    %c0_i32_1 = arith.constant 0 : i32
    return %arg0, %c0_i32, %c0_i32_0 : i32, i32, i32
  }
  func.func @transform_1(%arg0: i32) -> (i32, i32, i32) {
    %c0_i32 = arith.constant 0 : i32
    %c0_i32_0 = arith.constant 0 : i32
    %c0_i32_1 = arith.constant 0 : i32
    return %arg0, %c0_i32, %c0_i32_0 : i32, i32, i32
  }
}

</mosaic_0001>

<llo_original>
// kernel: tpu_custom_call.1
$region0: #{tpu_custom_call.1}
  #allocation0 [shape = 'u32[]', space=smem, size = 0x4, offset = 0x4, fixed_abs, tag = 'smem constant byte address 0x4 - core index']
  #allocation1 [shape = 'u32[144,128]{1,0:T(1,128)}', space=vmem, size = 0x12000, scoped, tag = 'internal scratch']
  %s0 = inlined_call_operand.hbm [shape: f32[8,16,16], index: 0, kind: input, shape index: {}]
  %s1 = inlined_call_operand.vmem [shape: f32[8,15,16], index: 1, kind: output, shape index: {}]
  %s2 = sld [smem:[#allocation0]]
  $region41: #{tpu_custom_call.1} parent=0
    _
  %s4 = ssub.s32 1, %s2
  %s5 = scalar_select 0, %s4, %s2
  $region1: #{tpu_custom_call.1} parent=0
    #allocation2 [shape = 'u8[16384]{0}', space=vmem, size = 0x4000, scoped, tag = 'input window, operand 0']
    #allocation3 [shape = 's32[2]{0}', space=sflag, size = 0x8, scoped, tag = 'scoped memory for tpu_custom_call.1']
    %6 = vsyncpa [#allocation3], 0
    %s7 = scalar_lea.sflag [#allocation3], 1
    %8 = vsyncpa %s7, 0
    loop: start=0, step=1, limit=10
    $region2: #{tpu_custom_call.1} parent=1 // loop_pre_header
      _
    $region3: #{tpu_custom_call.1} parent=1 // loop_header
      %s10 = sphi 0, %s14
      %p11 = scmp.ge.s32.totalorder %s10, 10
      %s20 = sphi 0, %s22
      %s23 = sphi 0, %s20
      %s24 = sphi 0, %s23
      %s40 = sphi 0, %s24
      %s46 = sphi 0, %s48
      %s49 = sphi 0, %s46
      %s50 = sphi 0, %s49
      %s66 = sphi 0, %s50
    $region4: #{tpu_custom_call.1} parent=1 // loop_header_branch
      %13 = sbr.rel (%p11) target = $region8
    $region5: #{tpu_custom_call.1} parent=1 // loop_body
      %s15 = ssub.s32 %s10, 1
      %s16 = ssub.s32 %s10, 2
      %s17 = sadd.s32 %s10, 1
      %s18 = ssub.s32 %s10, %s17
      %p19 = scmp.eq.s32.totalorder %s18, 0
      %s21 = sadd.s32 %s20, 1
      %s22 = scalar_select %p19, %s20, %s21
      %p25 = pneg %p19
      %p26 = scmp.eq.s32.totalorder %s10, 7
      %p27 = por %p25, %p26
      %p28 = scmp.ne.s32.totalorder %s20, %s23
      %p29 = scmp.eq.s32.totalorder %s10, 0
      %p30 = por %p28, %p29
      %p31 = scmp.ne.s32.totalorder %s20, %s23
      %p32 = scmp.eq.s32.totalorder %s15, 7
      %p33 = por %p31, %p32
      %p34 = scmp.ne.s32.totalorder %s23, %s24
      %p35 = scmp.eq.s32.totalorder %s15, 0
      %p36 = por %p34, %p35
      %p37 = scmp.ne.s32.totalorder %s23, %s24
      %p38 = scmp.eq.s32.totalorder %s16, 7
      %p39 = por %p37, %p38
      %p41 = scmp.ne.s32.totalorder %s24, %s40
      %p42 = scmp.eq.s32.totalorder %s16, 0
      %p43 = por %p41, %p42
      %s44 = ssub.s32 %s10, %s17
      %p45 = scmp.eq.s32.totalorder %s44, 0
      %s47 = sadd.s32 %s46, 1
      %s48 = scalar_select %p45, %s46, %s47
      %p51 = pneg %p45
      %p52 = scmp.eq.s32.totalorder %s10, 7
      %p53 = por %p51, %p52
      %p54 = scmp.ne.s32.totalorder %s46, %s49
      %p55 = scmp.eq.s32.totalorder %s10, 0
      %p56 = por %p54, %p55
      %p57 = scmp.ne.s32.totalorder %s46, %s49
      %p58 = scmp.eq.s32.totalorder %s15, 7
      %p59 = por %p57, %p58
      %p60 = scmp.ne.s32.totalorder %s49, %s50
      %p61 = scmp.eq.s32.totalorder %s15, 0
      %p62 = por %p60, %p61
      %p63 = scmp.ne.s32.totalorder %s49, %s50
      %p64 = scmp.eq.s32.totalorder %s16, 7
      %p65 = por %p63, %p64
      %p67 = scmp.ne.s32.totalorder %s50, %s66
      %p68 = scmp.eq.s32.totalorder %s16, 0
      %p69 = por %p67, %p68
      %p70 = scmp.le.s32.totalorder 1, %s10
      %p71 = scmp.lt.s32.totalorder %s10, 9
      %p72 = pnand %p70, %p71
      %p73 = pneg %p72
      // Predicated region
      $region9: #{tpu_custom_call.1} parent=5 // pred_check
        _
      $region10: #{tpu_custom_call.1} parent=5 // pred_check_branch
        %75 = sbr.rel (%p72) target = $region12
      $region11: #{tpu_custom_call.1} parent=5 // pred_region
        %s76 = ssub.s32 %s10, 1
      $region12: #{tpu_custom_call.1} parent=5 // pred_fallthru
        _
      %p77 = scmp.lt.s32.totalorder %s10, 8
      // Predicated region
      $region13: #{tpu_custom_call.1} parent=5 // pred_check
        %p78 = pneg %p77
      $region14: #{tpu_custom_call.1} parent=5 // pred_check_branch
        %80 = sbr.rel (%p78) target = $region16
      $region15: #{tpu_custom_call.1} parent=5 // pred_region
        // Predicated region
        $region17: #{tpu_custom_call.1} parent=15 // pred_check
          %p81 = pneg %p30
        $region18: #{tpu_custom_call.1} parent=15 // pred_check_branch
          %83 = sbr.rel (%p81) target = $region20
        $region19: #{tpu_custom_call.1} parent=15 // pred_region
          %s84 = sand.u32 %s20, 1
          %s85 = scalar_lea.sflag [#allocation3], %s84
          %s86 = sand.u32 %s20, 1
          %s87 = smul.addr %s86, 16
          %s88 = scalar_lea.vmem [#allocation2], %s87
          %s90 = ssub.s32 256, 256
          %91 = vsyncadd %s85, %s90
          %s92 = smul.addr %s10, 2
          %s93 = smul.addr %s92, 128
          %s94 = scalar_lea.hbm %s0, %s93
          %s95 = sshll.u32 %s88, 4
          %s96 = int_to_ptr.vmem [resolvable:$true] %s95
          %101 = dma.hbm_to_vmem [thread:$0]  %s94, 256, %s96, %s85, 128, 128, 8
        $region20: #{tpu_custom_call.1} parent=15 // pred_fallthru
          _
      $region16: #{tpu_custom_call.1} parent=5 // pred_fallthru
        _
      %p102 = scmp.le.s32.totalorder 1, %s10
      %p103 = scmp.lt.s32.totalorder %s10, 9
      %p104 = pnand %p102, %p103
      %p105 = pneg %p104
      // Predicated region
      $region21: #{tpu_custom_call.1} parent=5 // pred_check
        _
      $region22: #{tpu_custom_call.1} parent=5 // pred_check_branch
        %107 = sbr.rel (%p104) target = $region24
      $region23: #{tpu_custom_call.1} parent=5 // pred_region
        %s108 = ssub.s32 %s10, 1
        %s109 = sand.u32 %s23, 1
        %s110 = scalar_lea.sflag [#allocation3], %s109
        %s111 = sand.u32 %s23, 1
        %s112 = smul.addr %s111, 16
        %s113 = scalar_lea.vmem [#allocation2], %s112
        // Predicated region
        $region25: #{tpu_custom_call.1} parent=23 // pred_check
          %p114 = pneg %p36
        $region26: #{tpu_custom_call.1} parent=23 // pred_check_branch
          %116 = sbr.rel (%p114) target = $region28
        $region27: #{tpu_custom_call.1} parent=23 // pred_region
          %117 = dma.done %s110, 256
        $region28: #{tpu_custom_call.1} parent=23 // pred_fallthru
          _
        %s118 = sand.u32 %s23, 1
        %s119 = scalar_lea.sflag [#allocation3], %s118
        %s120 = sand.u32 %s23, 1
        %s121 = smul.addr %s120, 16
        %s122 = scalar_lea.vmem [#allocation2], %s121
        %p123 = pneg %p36
        %p124 = pneg %p33
        %p125 = pneg %p62
        %p126 = pneg %p59
        %p127 = scmp.lt.s32.totalorder %s15, 7
        %s128 = scalar_select %p127, %s15, 7
        %s129 = smul.addr %s128, 2
        %s130 = smul.addr %s129, 8
        %s131 = scalar_lea.vmem %s1, %s130
        %p132 = scmp.lt.s32.totalorder %s15, 7
        %s133 = scalar_select %p132, %s15, 7
        %s134 = smul.addr %s133, 2
        %s135 = smul.addr %s134, 8
        %s136 = scalar_lea.vmem %s1, %s135
        %v137 = vld [vmem:[%s113] sm:$0xff]
        %v138 = vld [vmem:[%s113 + $0x8] sm:$0x7f]
        %vm139 = vcmask 130048
        %140 = vst.msk [vmem:[%s136] sm:$0xff] %vm139, %v137
        %vm141 = vcmask 129024
        %142 = vst.msk [vmem:[%s136 + $0x8] sm:$0x7f] %vm141, %v138
        %p143 = scmp.lt.s32.totalorder %s15, 7
        %s144 = scalar_select %p143, %s15, 7
        %s145 = smul.addr %s144, 2
        %s146 = smul.addr %s145, 8
        %s147 = scalar_lea.vmem %s1, %s146
        // Predicated region
        $region29: #{tpu_custom_call.1} parent=23 // pred_check
          %p148 = pneg %p59
        $region30: #{tpu_custom_call.1} parent=23 // pred_check_branch
          %150 = sbr.rel (%p148) target = $region32
        $region31: #{tpu_custom_call.1} parent=23 // pred_region
          _
        $region32: #{tpu_custom_call.1} parent=23 // pred_fallthru
          _
      $region24: #{tpu_custom_call.1} parent=5 // pred_fallthru
        _
      %p151 = scmp.le.s32.totalorder 2, %s10
      // Predicated region
      $region33: #{tpu_custom_call.1} parent=5 // pred_check
        %p152 = pneg %p151
      $region34: #{tpu_custom_call.1} parent=5 // pred_check_branch
        %154 = sbr.rel (%p152) target = $region36
      $region35: #{tpu_custom_call.1} parent=5 // pred_region
        %s155 = ssub.s32 %s10, 2
        // Predicated region
        $region37: #{tpu_custom_call.1} parent=35 // pred_check
          %p156 = pneg %p65
        $region38: #{tpu_custom_call.1} parent=35 // pred_check_branch
          %158 = sbr.rel (%p156) target = $region40
        $region39: #{tpu_custom_call.1} parent=35 // pred_region
          %p159 = scmp.lt.s32.totalorder %s16, 7
          %s160 = scalar_select %p159, %s16, 7
          %s161 = smul.addr %s160, 2
          %s162 = smul.addr %s161, 8
          %s163 = scalar_lea.vmem %s1, %s162
        $region40: #{tpu_custom_call.1} parent=35 // pred_fallthru
          _
      $region36: #{tpu_custom_call.1} parent=5 // pred_fallthru
        _
    $region6: #{tpu_custom_call.1} parent=1 // loop_footer
      %s14 = sadd.s32 1, %s10
    $region7: #{tpu_custom_call.1} parent=1 // loop_footer_branch
      %9 = sbr.rel target = $region3
    $region8: #{tpu_custom_call.1} parent=1 // loop_exit
      _
    %164 = vsyncpa [#allocation3], 1
    %s165 = scalar_lea.sflag [#allocation3], 1
    %166 = vsyncpa %s165, 1

</llo_original>
